<compile_context>
chip_gen: v5e
topology: v5e:2x2
jax: 0.10.0
libtpu: 0.0.40
codegen_flags: <defaults>
</compile_context>

<pallas_src>
import functools
import math

import jax
import jax.numpy as jnp
from jax.experimental import pallas as pl
from jax.experimental.pallas import tpu as pltpu


# ---------------------------------------------------------------------------
# Kernels
# ---------------------------------------------------------------------------

def _eca_kernel_taps(w_ref, x_ref, o_ref, *, k, pad, channels):
    """w_ref: (k,) f32 taps in SMEM (already scaled by 1/(H*W)).
       x_ref / o_ref: (Bt, C, HW) blocks (lane-dense last axis)."""
    x = x_ref[...]                                         # (Bt, C, HW)

    # Global average pool: plain sum; the 1/(H*W) lives in the taps.
    s = jnp.sum(x.astype(jnp.float32), axis=-1)            # (Bt, C)

    # Conv1d over the channel axis: zero-pad channels, take k shifted views,
    # scalar-tap FMAs on the VPU.
    if pad > 0:
        zeros = jnp.zeros((s.shape[0], pad), dtype=jnp.float32)
        s_pad = jnp.concatenate([zeros, s, zeros], axis=-1)  # (Bt, C + 2*pad)
    else:
        s_pad = s
    acc = w_ref[0] * s_pad[:, 0:channels]
    for j in range(1, k):
        acc = acc + w_ref[j] * s_pad[:, j:j + channels]

    attn = jax.nn.sigmoid(acc)                             # (Bt, C) f32
    o_ref[...] = (x * attn.astype(x.dtype)[:, :, None]).astype(o_ref.dtype)


def _eca_kernel_matmul(wband_ref, x_ref, o_ref):
    """Fallback: conv expressed as a (C, C) banded matmul (weights already
    scaled by 1/(H*W)). Same lane-dense layout and batch tiling."""
    x = x_ref[...]                                         # (Bt, C, HW)
    s = jnp.sum(x.astype(jnp.float32), axis=-1)            # (Bt, C)
    logits = jnp.dot(s, wband_ref[...], preferred_element_type=jnp.float32)
    attn = jax.nn.sigmoid(logits)
    o_ref[...] = (x * attn.astype(x.dtype)[:, :, None]).astype(o_ref.dtype)


# ---------------------------------------------------------------------------
# Parameter setup helpers (plain JAX / Python glue)
# ---------------------------------------------------------------------------

def _eca_kernel_size(channel, gamma=2, b=1):
    k = int(abs((math.log(channel, 2) + b) / gamma))
    return k if k % 2 else k + 1


def _build_banded_weight(conv_w, channel):
    """conv_w: (k,) -> (C, C) banded matrix W so that out = avg @ W reproduces
    Conv1d(1, 1, k, padding=k//2, bias=False) over the channel axis."""
    k = conv_w.shape[0]
    pad = k // 2
    i = jnp.arange(channel)[:, None]          # input channel index
    c = jnp.arange(channel)[None, :]          # output channel index
    tap = i - c + pad                         # which conv tap connects i -> c
    valid = (tap >= 0) & (tap < k)
    tap_clamped = jnp.clip(tap, 0, k - 1)
    return jnp.where(valid, conv_w[tap_clamped], 0.0).astype(jnp.float32)


# ---------------------------------------------------------------------------
# Wrapper
# ---------------------------------------------------------------------------

def eca_block(x, conv_w, *, vmem_limit_bytes=40 * 1024 * 1024):
    """x: (B, C, H, W); conv_w: (k,) Conv1d(1,1,k) weights. Returns (B,C,H,W)."""
    B, C, H, W = x.shape
    HW = H * W
    K = int(conv_w.shape[0])
    pad = K // 2

    # Lane-dense layout: flatten spatial dims onto the lane axis.
    x3 = x.reshape(B, C, HW)

    # Fold the average-pool normalization into the (linear) conv taps.
    w_taps = (conv_w.astype(jnp.float32) / float(HW)).reshape(K)

    # Batch tile: biggest Bt whose double-buffered in+out blocks fit a budget,
    # then rounded down so it divides B (worst case Bt = 1).
    block_budget = 32 * 1024 * 1024
    per_batch_bytes = 4 * C * HW * x.dtype.itemsize   # (in + out) x double buffer
    bt = max(1, min(B, block_budget // max(per_batch_bytes, 1)))
    while B % bt:
        bt -= 1
    grid = (B // bt,)

    x_spec = pl.BlockSpec((bt, C, HW), lambda i: (i, 0, 0))
    out_spec = pl.BlockSpec((bt, C, HW), lambda i: (i, 0, 0))
    out_shape = jax.ShapeDtypeStruct((B, C, HW), x.dtype)
    cparams = pltpu.CompilerParams(
        dimension_semantics=("parallel",),
        vmem_limit_bytes=vmem_limit_bytes,
    )

    def run_taps():
        kernel = functools.partial(_eca_kernel_taps, k=K, pad=pad, channels=C)
        return pl.pallas_call(
            kernel,
            out_shape=out_shape,
            grid_spec=pltpu.PrefetchScalarGridSpec(
                num_scalar_prefetch=0,
                grid=grid,
                in_specs=[
                    pl.BlockSpec(memory_space=pltpu.MemorySpace.SMEM),  # taps
                    x_spec,
                ],
                out_specs=out_spec,
            ),
            compiler_params=cparams,
        )(w_taps, x3)

    def run_matmul():
        wband = _build_banded_weight(conv_w, C) / float(HW)
        return pl.pallas_call(
            _eca_kernel_matmul,
            out_shape=out_shape,
            grid_spec=pltpu.PrefetchScalarGridSpec(
                num_scalar_prefetch=0,
                grid=grid,
                in_specs=[
                    pl.BlockSpec((C, C), lambda i: (0, 0)),
                    x_spec,
                ],
                out_specs=out_spec,
            ),
            compiler_params=cparams,
        )(wband, x3)

    try:
        out = jax.block_until_ready(run_taps())
    except Exception:
        # TODO(synk): fallback only if the shifted-tap conv fails to lower on
        # this Mosaic build; the banded matmul is correct but less efficient.
        out = jax.block_until_ready(run_matmul())
    return out.reshape(B, C, H, W)


# ---------------------------------------------------------------------------
# Pure-JAX reference (mirrors the PyTorch forward)
# ---------------------------------------------------------------------------

def eca_reference(x, conv_w):
    B, C, H, W = x.shape
    k = conv_w.shape[0]
    pad = k // 2
    avg = jnp.mean(x, axis=(2, 3))                         # (B, C)
    avg_p = jnp.pad(avg, ((0, 0), (pad, pad)))
    out = jnp.zeros_like(avg)
    for j in range(k):
        out = out + conv_w[j] * avg_p[:, j:j + C]
    attn = jax.nn.sigmoid(out)                             # (B, C)
    return x * attn[:, :, None, None]


if __name__ == "__main__":
    B, C, H, W = 2, 16, 16, 16    # channel=16 -> kernel_size=3, padding=1
    key = jax.random.PRNGKey(0)
    kx, kw = jax.random.split(key)

    x = jax.random.normal(kx, (B, C, H, W), dtype=jnp.float32)

    k = _eca_kernel_size(C)       # = 3 for C=16
    bound = 1.0 / math.sqrt(1 * k)   # PyTorch-style Conv1d uniform init bound
    conv_w = jax.random.uniform(kw, (k,), minval=-bound, maxval=bound,
                                dtype=jnp.float32)

    y = eca_block(x, conv_w)
    y = jax.block_until_ready(y)

    y_ref = eca_reference(x, conv_w)
    assert jnp.allclose(y, y_ref, atol=1e-5, rtol=1e-5), "mismatch vs reference"

    print("KERNEL_OK")
</pallas_src>

<mosaic_0001>
module attributes {stable_mosaic.version = 11 : i64} {
  func.func @_eca_kernel_taps(%arg0: i32, %arg1: memref<3xf32, #tpu.memory_space<smem>>, %arg2: memref<2x16x256xf32, #tpu.memory_space<vmem>>, %arg3: memref<2x16x256xf32, #tpu.memory_space<vmem>>) attributes {dimension_semantics = [#tpu.dimension_semantics<parallel>], iteration_bounds = array<i64: 1>, scalar_prefetch = 0 : i64, scratch_operands = 0 : i64, tpu.core_type = #tpu.core_type<tc>, window_params = [{transform_indices = @transform_0, window_bounds = array<i64: 3>}, {transform_indices = @transform_1, window_bounds = array<i64: 2, 16, 256>}, {transform_indices = @transform_2, window_bounds = array<i64: 2, 16, 256>}]} {
    %c0 = arith.constant 0 : index
    %c0_0 = arith.constant 0 : index
    %c0_1 = arith.constant 0 : index
    %0 = vector.load %arg2[%c0, %c0_0, %c0_1] : memref<2x16x256xf32, #tpu.memory_space<vmem>>, vector<2x16x256xf32>
    %cst = arith.constant dense<0.000000e+00> : vector<2x16xf32>
    %1 = vector.multi_reduction <add>, %0, %cst [2] : vector<2x16x256xf32> to vector<2x16xf32>
    %cst_2 = arith.constant 0.000000e+00 : f32
    %2 = vector.broadcast %cst_2 : f32 to vector<2x1xf32>
    %3 = tpu.concatenate %2, %1, %2 in 1 : vector<2x1xf32>, vector<2x16xf32>, vector<2x1xf32> -> vector<2x18xf32>
    %c0_3 = arith.constant 0 : index
    %4 = memref.load %arg1[%c0_3] : memref<3xf32, #tpu.memory_space<smem>>
    %5 = vector.extract_strided_slice %3 {offsets = [0, 0], sizes = [2, 16], strides = [1, 1]} : vector<2x18xf32> to vector<2x16xf32>
    %6 = vector.broadcast %4 : f32 to vector<2x16xf32>
    %7 = arith.mulf %6, %5 : vector<2x16xf32>
    %c1 = arith.constant 1 : index
    %8 = memref.load %arg1[%c1] : memref<3xf32, #tpu.memory_space<smem>>
    %9 = vector.extract_strided_slice %3 {offsets = [0, 1], sizes = [2, 16], strides = [1, 1]} : vector<2x18xf32> to vector<2x16xf32>
    %10 = vector.broadcast %8 : f32 to vector<2x16xf32>
    %11 = arith.mulf %10, %9 : vector<2x16xf32>
    %12 = arith.addf %7, %11 : vector<2x16xf32>
    %c2 = arith.constant 2 : index
    %13 = memref.load %arg1[%c2] : memref<3xf32, #tpu.memory_space<smem>>
    %14 = vector.extract_strided_slice %3 {offsets = [0, 2], sizes = [2, 16], strides = [1, 1]} : vector<2x18xf32> to vector<2x16xf32>
    %15 = vector.broadcast %13 : f32 to vector<2x16xf32>
    %16 = arith.mulf %15, %14 : vector<2x16xf32>
    %17 = arith.addf %12, %16 : vector<2x16xf32>
    %18 = arith.negf %17 : vector<2x16xf32>
    %19 = math.exp %18 : vector<2x16xf32>
    %cst_4 = arith.constant 1.000000e+00 : f32
    %20 = vector.broadcast %cst_4 : f32 to vector<2x16xf32>
    %21 = arith.addf %20, %19 : vector<2x16xf32>
    %22 = arith.divf %20, %21 : vector<2x16xf32>
    %23 = vector.shape_cast %22 : vector<2x16xf32> to vector<2x16x1xf32>
    %24 = vector.broadcast %23 : vector<2x16x1xf32> to vector<2x16x256xf32>
    %25 = arith.mulf %0, %24 : vector<2x16x256xf32>
    %c0_5 = arith.constant 0 : index
    %c0_6 = arith.constant 0 : index
    %c0_7 = arith.constant 0 : index
    %26 = vector.load %arg3[%c0_5, %c0_6, %c0_7] : memref<2x16x256xf32, #tpu.memory_space<vmem>>, vector<2x16x256xf32>
    tpu.vector_store %arg3[%c0_5, %c0_6, %c0_7], %25 {strides = array<i32>} : memref<2x16x256xf32, #tpu.memory_space<vmem>>, vector<2x16x256xf32>,
    return
  }
  func.func @transform_0(%arg0: i32) -> i32 {
    %c0_i32 = arith.constant 0 : i32
    %c0_i32_0 = arith.constant 0 : i32
    return %c0_i32 : i32
  }
  func.func @transform_1(%arg0: i32) -> (i32, i32, i32) {
    %c0_i32 = arith.constant 0 : i32
    %c0_i32_0 = arith.constant 0 : i32
    %c0_i32_1 = arith.constant 0 : i32
    return %arg0, %c0_i32, %c0_i32_0 : i32, i32, i32
  }
  func.func @transform_2(%arg0: i32) -> (i32, i32, i32) {
    %c0_i32 = arith.constant 0 : i32
    %c0_i32_0 = arith.constant 0 : i32
    %c0_i32_1 = arith.constant 0 : i32
    return %arg0, %c0_i32, %c0_i32_0 : i32, i32, i32
  }
}

module attributes {stable_mosaic.version = 11 : i64} {
  func.func @_eca_kernel_matmul(%arg0: i32, %arg1: memref<16x16xf32, #tpu.memory_space<vmem>>, %arg2: memref<2x16x256xf32, #tpu.memory_space<vmem>>, %arg3: memref<2x16x256xf32, #tpu.memory_space<vmem>>) attributes {dimension_semantics = [#tpu.dimension_semantics<parallel>], iteration_bounds = array<i64: 1>, scalar_prefetch = 0 : i64, scratch_operands = 0 : i64, tpu.core_type = #tpu.core_type<tc>, window_params = [{pipeline_mode = #tpu.pipeline_mode<synchronous>, transform_indices = @transform_0, window_bounds = array<i64: 16, 16>}, {transform_indices = @transform_1, window_bounds = array<i64: 2, 16, 256>}, {transform_indices = @transform_2, window_bounds = array<i64: 2, 16, 256>}]} {
    %c0 = arith.constant 0 : index
    %c0_0 = arith.constant 0 : index
    %c0_1 = arith.constant 0 : index
    %0 = vector.load %arg2[%c0, %c0_0, %c0_1] : memref<2x16x256xf32, #tpu.memory_space<vmem>>, vector<2x16x256xf32>
    %cst = arith.constant dense<0.000000e+00> : vector<2x16xf32>
    %1 = vector.multi_reduction <add>, %0, %cst [2] : vector<2x16x256xf32> to vector<2x16xf32>
    %c0_2 = arith.constant 0 : index
    %c0_3 = arith.constant 0 : index
    %2 = vector.load %arg1[%c0_2, %c0_3] : memref<16x16xf32, #tpu.memory_space<vmem>>, vector<16x16xf32>
    %cst_4 = arith.constant dense<0.000000e+00> : vector<2x16xf32>
    %3 = tpu.matmul %1, %2, %cst_4 {dimension_numbers = #tpu.dot_dimension_numbers<[1], [0], [0], [1], [0, 0, 1, 1], [], []>} : vector<2x16xf32>, vector<16x16xf32>, vector<2x16xf32> -> vector<2x16xf32>
    %4 = arith.negf %3 : vector<2x16xf32>
    %5 = math.exp %4 : vector<2x16xf32>
    %cst_5 = arith.constant 1.000000e+00 : f32
    %6 = vector.broadcast %cst_5 : f32 to vector<2x16xf32>
    %7 = arith.addf %6, %5 : vector<2x16xf32>
    %8 = arith.divf %6, %7 : vector<2x16xf32>
    %9 = vector.shape_cast %8 : vector<2x16xf32> to vector<2x16x1xf32>
    %10 = vector.broadcast %9 : vector<2x16x1xf32> to vector<2x16x256xf32>
    %11 = arith.mulf %0, %10 : vector<2x16x256xf32>
    %c0_6 = arith.constant 0 : index
    %c0_7 = arith.constant 0 : index
    %c0_8 = arith.constant 0 : index
    %12 = vector.load %arg3[%c0_6, %c0_7, %c0_8] : memref<2x16x256xf32, #tpu.memory_space<vmem>>, vector<2x16x256xf32>
    tpu.vector_store %arg3[%c0_6, %c0_7, %c0_8], %11 {strides = array<i32>} : memref<2x16x256xf32, #tpu.memory_space<vmem>>, vector<2x16x256xf32>,
    return
  }
  func.func @transform_0(%arg0: i32) -> (i32, i32) {
    %c0_i32 = arith.constant 0 : i32
    %c0_i32_0 = arith.constant 0 : i32
    %c0_i32_1 = arith.constant 0 : i32
    return %c0_i32, %c0_i32_0 : i32, i32
  }
  func.func @transform_1(%arg0: i32) -> (i32, i32, i32) {
    %c0_i32 = arith.constant 0 : i32
    %c0_i32_0 = arith.constant 0 : i32
    %c0_i32_1 = arith.constant 0 : i32
    return %arg0, %c0_i32, %c0_i32_0 : i32, i32, i32
  }
  func.func @transform_2(%arg0: i32) -> (i32, i32, i32) {
    %c0_i32 = arith.constant 0 : i32
    %c0_i32_0 = arith.constant 0 : i32
    %c0_i32_1 = arith.constant 0 : i32
    return %arg0, %c0_i32, %c0_i32_0 : i32, i32, i32
  }
}

</mosaic_0001>

<llo_original>
// kernel: tpu_custom_call.1
$region0: #{tpu_custom_call.1}
  #allocation0 [shape = 'u32[]', space=smem, size = 0x4, offset = 0x4, fixed_abs, tag = 'smem constant byte address 0x4 - core index']
  #allocation1 [shape = 'u32[72,128]{1,0:T(1,128)}', space=vmem, size = 0x9000, scoped, tag = 'internal scratch']
  %s0 = inlined_call_operand.hbm [shape: f32[3], index: 0, kind: input, shape index: {}]
  %s1 = inlined_call_operand.hbm [shape: f32[2,16,256], index: 1, kind: input, shape index: {}]
  %s2 = inlined_call_operand.hbm [shape: f32[2,16,256], index: 2, kind: output, shape index: {}]
  %s3 = sld [smem:[#allocation0]]
  $region26: #{tpu_custom_call.1} parent=0
    _
  %s5 = ssub.s32 1, %s3
  %s6 = scalar_select 0, %s5, %s3
  $region1: #{tpu_custom_call.1} parent=0
    #allocation2 [shape = 'u8[512]{0}', space=smem, size = 0x200, scoped, tag = 'input window, operand 0, single buffered']
    #allocation3 [shape = 's32[1]{0}', space=sflag, size = 0x4, scoped, tag = 'scoped memory for tpu_custom_call.1']
    #allocation4 [shape = 's32[1]{0}', space=sflag, size = 0x4, scoped, tag = 'scoped memory for tpu_custom_call.1']
    #allocation5 [shape = 's32[1]{0}', space=sflag, size = 0x4, scoped, tag = 'scoped memory for tpu_custom_call.1']
    #allocation6 [shape = 'u8[32768]{0}', space=vmem, size = 0x8000, scoped, tag = 'input window, operand 1, single buffered']
    #allocation7 [shape = 'u8[32768]{0}', space=vmem, size = 0x8000, scoped, tag = 'output window, operand 0, single buffered']
    %7 = vsyncpa [#allocation5], 0
    %8 = vsyncpa [#allocation3], 0
    %9 = vsyncpa [#allocation4], 0
    // Predicated region
    $region2: #{tpu_custom_call.1} parent=1 // pred_check
      _
    $region3: #{tpu_custom_call.1} parent=1 // pred_check_branch
      %11 = sbr.rel (0) target = $region5
    $region4: #{tpu_custom_call.1} parent=1 // pred_region
      %13 = vsyncadd [#allocation5], 0
      %s15 = sshll.u32 %s0, 4
      %s16 = int_to_ptr.hbm [resolvable:$true] %s15
      %18 = dma.hbm_to_smem %s16, 16, [#allocation2], [#allocation5]
    $region5: #{tpu_custom_call.1} parent=1 // pred_fallthru
      _
    // Predicated region
    $region6: #{tpu_custom_call.1} parent=1 // pred_check
      _
    $region7: #{tpu_custom_call.1} parent=1 // pred_check_branch
      %20 = sbr.rel (0) target = $region9
    $region8: #{tpu_custom_call.1} parent=1 // pred_region
      %22 = vsyncadd [#allocation3], 0
      %s23 = sshll.u32 %s1, 4
      %s24 = int_to_ptr.hbm [resolvable:$true] %s23
      %s25 = sshll.u32 [#allocation6], 4
      %s26 = int_to_ptr.vmem [resolvable:$true] %s25
      %31 = dma.hbm_to_vmem [thread:$0]  %s24, 1024, %s26, [#allocation3], 256, 256, 16
    $region9: #{tpu_custom_call.1} parent=1 // pred_fallthru
      _
    // Predicated region
    $region10: #{tpu_custom_call.1} parent=1 // pred_check
      _
    $region11: #{tpu_custom_call.1} parent=1 // pred_check_branch
      %33 = sbr.rel (0) target = $region13
    $region12: #{tpu_custom_call.1} parent=1 // pred_region
      %35 = dma.done [#allocation5], 16
    $region13: #{tpu_custom_call.1} parent=1 // pred_fallthru
      _
    // Predicated region
    $region14: #{tpu_custom_call.1} parent=1 // pred_check
      _
    $region15: #{tpu_custom_call.1} parent=1 // pred_check_branch
      %37 = sbr.rel (0) target = $region17
    $region16: #{tpu_custom_call.1} parent=1 // pred_region
      %39 = dma.done [#allocation3], 1024
    $region17: #{tpu_custom_call.1} parent=1 // pred_fallthru
      _
    %40 = sfence
    %v41 = vld [vmem:[#allocation6] sm:$0xff]
    %v42 = vld [vmem:[#allocation6 + $0x8] sm:$0xff]
    %v43 = vld [vmem:[#allocation6 + $0x10] sm:$0xff]
    %v44 = vld [vmem:[#allocation6 + $0x18] sm:$0xff]
    %v45 = vld [vmem:[#allocation6 + $0x20] sm:$0xff]
    %v46 = vld [vmem:[#allocation6 + $0x28] sm:$0xff]
    %v47 = vld [vmem:[#allocation6 + $0x30] sm:$0xff]
    %v48 = vld [vmem:[#allocation6 + $0x38] sm:$0xff]
    %v49 = vadd.f32 %v41, %v42
    %50 = vadd.xlane.f32.xlu0 %v49
    %v51 = vpop.xlane.xlu0 %50
    %v52 = vadd.f32 %v43, %v44
    %53 = vadd.xlane.f32.xlu0 %v52
    %v54 = vpop.xlane.xlu0 %53
    %v55 = vadd.f32 %v45, %v46
    %56 = vadd.xlane.f32.xlu0 %v55
    %v57 = vpop.xlane.xlu0 %56
    %v58 = vadd.f32 %v47, %v48
    %59 = vadd.xlane.f32.xlu0 %v58
    %v60 = vpop.xlane.xlu0 %59
    %v65 = vlaneseq
    %v66 = vand.u32 %v65, 127
    %v67 = vadd.s32 %v66, 4294967295
    %v68 = vperm.slane %v51, %v67
    %v69 = vadd.s32 %v66, 4294967287
    %v70 = vperm.slane %v54, %v69
    %vm71 = vcmask 138312
    %v72 = vsel %vm71, %v70, %v68
    %v73 = vperm.slane %v57, %v67
    %v74 = vperm.slane %v60, %v69
    %v75 = vsel %vm71, %v74, %v73
    %vm76 = vcmask 1041409
    %v77 = vsel %vm76, %v75, %v72
    %vm79 = vcmask 7168
    %v80 = vsel %vm79, 0.0, %v77
    %vm81 = vcmask 138240
    %v82 = vsel %vm81, %v80, 0.0
    %s83 = sld [smem:[#allocation2]]
    %v84 = vstv %s83
    %v85 = vmul.f32 %v84, %v82
    %s86 = sld [smem:[#allocation2 + $0x1]]
    %v87 = vstv %s86
    %v88 = vmul.f32 %v87, %v82
    %90 = vrot.lane.b32.xlu0 %v88, 127
    %v91 = vpop.permute.xlu0 %90
    %v93 = vadd.f32 %v85, %v91
    %s94 = sld [smem:[#allocation2 + $0x2]]
    %v95 = vstv %s94
    %v96 = vmul.f32 %v95, %v82
    %98 = vrot.lane.b32.xlu0 %v96, 126
    %v99 = vpop.permute.xlu0 %98
    %v101 = vadd.f32 %v93, %v99
    %v102 = vxor.u32 %v101, 2147483648
    %v103 = vmul.f32 %v102, 1.442695
    %v104 = vpow.pop %v103
    %v105 = vadd.f32 %v104, 1.0
    %v106 = vrcp.pop %v105
    %v107 = vmul.f32 %v105, %v106
    %v108 = vsub.f32 1.0, %v107
    %v109 = vmul.f32 %v106, %v108
    %v110 = vadd.f32 %v106, %v109
    %vm111 = vweird.f32 %v105
    %vm112 = vweird.f32 %v106
    %vm113 = vmor %vm111, %vm112
    %v114 = vsel %vm113, %v106, %v110
    %v115 = vand.u32 2147483647, %v105
    %vm116 = vcmp.eq.f32.partialorder %v115, 8.507059e+37
    %v117 = vand.u32 %v105, 2147483648
    %v118 = vor.u32 1.1754944e-38, %v117
    %v119 = vsel %vm116, %v118, %v114
    %v120 = vmul.f32 1.0, %v119
    %v121 = vperm.slane %v120, 0
    %v122 = vlaneseq
    %v123 = vshrl.u32 %v122, 7
    %125 = vset.pattern.permute.xlu0 %v123
    %126 = vperm.xlu0 %125, %v121
    %v127 = vpop.permute.xlu0 %126
    %v128 = vlaneseq
    %v129 = vshrl.u32 %v128, 7
    %v130 = vadd.s32 %v129, 8
    %131 = vset.pattern.permute.xlu0 %v130
    %132 = vperm.xlu0 %131, %v121
    %v133 = vpop.permute.xlu0 %132
    %v134 = vperm.slane %v120, 1
    %v135 = vlaneseq
    %v136 = vshrl.u32 %v135, 7
    %138 = vset.pattern.permute.xlu0 %v136
    %139 = vperm.xlu0 %138, %v134
    %v140 = vpop.permute.xlu0 %139
    %v141 = vlaneseq
    %v142 = vshrl.u32 %v141, 7
    %v143 = vadd.s32 %v142, 8
    %144 = vset.pattern.permute.xlu0 %v143
    %145 = vperm.xlu0 %144, %v134
    %v146 = vpop.permute.xlu0 %145
    %v147 = vmul.f32 %v41, %v127
    %v148 = vmul.f32 %v42, %v127
    %v149 = vmul.f32 %v43, %v133
    %v150 = vmul.f32 %v44, %v133
    %v151 = vmul.f32 %v45, %v140
    %v152 = vmul.f32 %v46, %v140
    %v153 = vmul.f32 %v47, %v146
    %v154 = vmul.f32 %v48, %v146
    %155 = vst [vmem:[#allocation7] sm:$0xff] %v147
    %156 = vst [vmem:[#allocation7 + $0x8] sm:$0xff] %v148
    %157 = vst [vmem:[#allocation7 + $0x10] sm:$0xff] %v149
    %158 = vst [vmem:[#allocation7 + $0x18] sm:$0xff] %v150
    %159 = vst [vmem:[#allocation7 + $0x20] sm:$0xff] %v151
    %160 = vst [vmem:[#allocation7 + $0x28] sm:$0xff] %v152
    %161 = vst [vmem:[#allocation7 + $0x30] sm:$0xff] %v153
    %162 = vst [vmem:[#allocation7 + $0x38] sm:$0xff] %v154
    // Predicated region
    $region18: #{tpu_custom_call.1} parent=1 // pred_check
      _
    $region19: #{tpu_custom_call.1} parent=1 // pred_check_branch
      %164 = sbr.rel (0) target = $region21
    $region20: #{tpu_custom_call.1} parent=1 // pred_region
      %166 = vsyncadd [#allocation4], 0
      %s167 = sshll.u32 [#allocation7], 4
      %s168 = int_to_ptr.vmem [resolvable:$true] %s167
      %s169 = sshll.u32 %s2, 4
      %s170 = int_to_ptr.hbm [resolvable:$true] %s169
      %175 = dma.vmem_to_hbm [thread:$0]  %s168, 1024, %s170, [#allocation4], 256, 256, 16
    $region21: #{tpu_custom_call.1} parent=1 // pred_fallthru
      _
    // Predicated region
    $region22: #{tpu_custom_call.1} parent=1 // pred_check
      _
    $region23: #{tpu_custom_call.1} parent=1 // pred_check_branch
      %177 = sbr.rel (0) target = $region25
    $region24: #{tpu_custom_call.1} parent=1 // pred_region
      %179 = dma.done [#allocation4], 1024
    $region25: #{tpu_custom_call.1} parent=1 // pred_fallthru
      _
    %180 = vsyncpa [#allocation3], 1
    %181 = vsyncpa [#allocation4], 1
    %182 = vsyncpa [#allocation5], 1

// kernel: tpu_custom_call.1
$region0: #{tpu_custom_call.1}
  #allocation0 [shape = 'u32[]', space=smem, size = 0x4, offset = 0x4, fixed_abs, tag = 'smem constant byte address 0x4 - core index']
  #allocation1 [shape = 'u32[72,128]{1,0:T(1,128)}', space=vmem, size = 0x9000, scoped, tag = 'internal scratch']
  %s0 = inlined_call_operand.hbm [shape: f32[16,16], index: 0, kind: input, shape index: {}]
  %s1 = inlined_call_operand.hbm [shape: f32[2,16,256], index: 1, kind: input, shape index: {}]
  %s2 = inlined_call_operand.hbm [shape: f32[2,16,256], index: 2, kind: output, shape index: {}]
  %s3 = sld [smem:[#allocation0]]
  $region26: #{tpu_custom_call.1} parent=0
    _
  %s5 = ssub.s32 1, %s3
  %s6 = scalar_select 0, %s5, %s3
  $region1: #{tpu_custom_call.1} parent=0
    #allocation2 [shape = 'u8[8192]{0}', space=vmem, size = 0x2000, scoped, tag = 'input window, operand 0, single buffered']
    #allocation3 [shape = 's32[1]{0}', space=sflag, size = 0x4, scoped, tag = 'scoped memory for tpu_custom_call.1']
    #allocation4 [shape = 's32[1]{0}', space=sflag, size = 0x4, scoped, tag = 'scoped memory for tpu_custom_call.1']
    #allocation5 [shape = 'u8[32768]{0}', space=vmem, size = 0x8000, scoped, tag = 'input window, operand 1, single buffered']
    #allocation6 [shape = 's32[1]{0}', space=sflag, size = 0x4, scoped, tag = 'scoped memory for tpu_custom_call.1']
    #allocation7 [shape = 'u8[32768]{0}', space=vmem, size = 0x8000, scoped, tag = 'output window, operand 0, single buffered']
    %7 = vsyncpa [#allocation3], 0
    %8 = vsyncpa [#allocation6], 0
    %9 = vsyncpa [#allocation4], 0
    // Predicated region
    $region2: #{tpu_custom_call.1} parent=1 // pred_check
      _
    $region3: #{tpu_custom_call.1} parent=1 // pred_check_branch
      %11 = sbr.rel (0) target = $region5
    $region4: #{tpu_custom_call.1} parent=1 // pred_region
      %13 = vsyncadd [#allocation3], 0
      %s14 = sshll.u32 %s0, 4
      %s15 = int_to_ptr.hbm [resolvable:$true] %s14
      %s16 = sshll.u32 [#allocation2], 4
      %s17 = int_to_ptr.vmem [resolvable:$true] %s16
      %22 = dma.hbm_to_vmem [thread:$0]  %s15, 256, %s17, [#allocation3], 128, 128, 8
    $region5: #{tpu_custom_call.1} parent=1 // pred_fallthru
      _
    // Predicated region
    $region6: #{tpu_custom_call.1} parent=1 // pred_check
      _
    $region7: #{tpu_custom_call.1} parent=1 // pred_check_branch
      %24 = sbr.rel (0) target = $region9
    $region8: #{tpu_custom_call.1} parent=1 // pred_region
      %26 = vsyncadd [#allocation6], 0
      %s27 = sshll.u32 %s1, 4
      %s28 = int_to_ptr.hbm [resolvable:$true] %s27
      %s29 = sshll.u32 [#allocation5], 4
      %s30 = int_to_ptr.vmem [resolvable:$true] %s29
      %35 = dma.hbm_to_vmem [thread:$0]  %s28, 1024, %s30, [#allocation6], 256, 256, 16
    $region9: #{tpu_custom_call.1} parent=1 // pred_fallthru
      _
    // Predicated region
    $region10: #{tpu_custom_call.1} parent=1 // pred_check
      _
    $region11: #{tpu_custom_call.1} parent=1 // pred_check_branch
      %37 = sbr.rel (0) target = $region13
    $region12: #{tpu_custom_call.1} parent=1 // pred_region
      %39 = dma.done [#allocation3], 256
    $region13: #{tpu_custom_call.1} parent=1 // pred_fallthru
      _
    // Predicated region
    $region14: #{tpu_custom_call.1} parent=1 // pred_check
      _
    $region15: #{tpu_custom_call.1} parent=1 // pred_check_branch
      %41 = sbr.rel (0) target = $region17
    $region16: #{tpu_custom_call.1} parent=1 // pred_region
      %43 = dma.done [#allocation6], 1024
    $region17: #{tpu_custom_call.1} parent=1 // pred_fallthru
      _
    %v44 = vld [vmem:[#allocation5] sm:$0xff]
    %v45 = vld [vmem:[#allocation5 + $0x8] sm:$0xff]
    %v46 = vld [vmem:[#allocation5 + $0x10] sm:$0xff]
    %v47 = vld [vmem:[#allocation5 + $0x18] sm:$0xff]
    %v48 = vld [vmem:[#allocation5 + $0x20] sm:$0xff]
    %v49 = vld [vmem:[#allocation5 + $0x28] sm:$0xff]
    %v50 = vld [vmem:[#allocation5 + $0x30] sm:$0xff]
    %v51 = vld [vmem:[#allocation5 + $0x38] sm:$0xff]
    %v52 = vadd.f32 %v44, %v45
    %53 = vadd.xlane.f32.xlu0 %v52
    %v54 = vpop.xlane.xlu0 %53
    %v55 = vadd.f32 %v46, %v47
    %56 = vadd.xlane.f32.xlu0 %v55
    %v57 = vpop.xlane.xlu0 %56
    %v58 = vadd.f32 %v48, %v49
    %59 = vadd.xlane.f32.xlu0 %v58
    %v60 = vpop.xlane.xlu0 %59
    %v61 = vadd.f32 %v50, %v51
    %62 = vadd.xlane.f32.xlu0 %v61
    %v63 = vpop.xlane.xlu0 %62
    %v64 = vld [vmem:[#allocation2] sm:$0xff]
    %v65 = vld [vmem:[#allocation2 + $0x8] sm:$0xff]
    %v70 = vlaneseq
    %v71 = vand.u32 %v70, 127
    %v72 = vperm.slane %v54, %v71
    %v73 = vadd.s32 %v71, 4294967288
    %v74 = vperm.slane %v57, %v73
    %vm75 = vcmask 130112
    %v76 = vsel %vm75, %v74, %v72
    %v77 = vperm.slane %v60, %v71
    %v78 = vperm.slane %v63, %v73
    %v79 = vsel %vm75, %v78, %v77
    %vm80 = vcmask 1041409
    %v81 = vsel %vm80, %v79, %v76
    %vm82 = vcmask 130048
    %v83 = vsel %vm82, %v81, 0
    %85 = vmatpush.msra.mxu0 0.0
    %86 = vmatpush.msra.mxu0 0.0
    %87 = vmatpush.msra.mxu0 0.0
    %88 = vmatpush.msra.mxu0 0.0
    %89 = vmatpush.msra.mxu0 0.0
    %90 = vmatpush.msra.mxu0 0.0
    %91 = vmatpush.msra.mxu0 0.0
    %92 = vmatpush.msra.mxu0 0.0
    %93 = vmatpush.msra.mxu0 0.0
    %94 = vmatpush.msra.mxu0 0.0
    %95 = vmatpush.msra.mxu0 0.0
    %96 = vmatpush.msra.mxu0 0.0
    %97 = vmatpush.msra.mxu0 0.0
    %98 = vmatpush.msra.mxu0 0.0
    %99 = vmatpush.msra.mxu0 %v65
    %100 = vmatpush.msra.mxu0 %v64
    %101 = vmatmul.f32.gmra.mxu0 %v83
    %v102 = vpop.f32.mrf.mxu0
    %v103 = vadd.f32 0.0, %v102
    %104 = vdwg.mxu0
    %v105 = vxor.u32 %v103, 2147483648
    %v106 = vmul.f32 %v105, 1.442695
    %v107 = vpow.pop %v106
    %v108 = vadd.f32 %v107, 1.0
    %v109 = vrcp.pop %v108
    %v110 = vmul.f32 %v108, %v109
    %v111 = vsub.f32 1.0, %v110
    %v112 = vmul.f32 %v109, %v111
    %v113 = vadd.f32 %v109, %v112
    %vm114 = vweird.f32 %v108
    %vm115 = vweird.f32 %v109
    %vm116 = vmor %vm114, %vm115
    %v117 = vsel %vm116, %v109, %v113
    %v118 = vand.u32 2147483647, %v108
    %vm119 = vcmp.eq.f32.partialorder %v118, 8.507059e+37
    %v120 = vand.u32 %v108, 2147483648
    %v121 = vor.u32 1.1754944e-38, %v120
    %v122 = vsel %vm119, %v121, %v117
    %v123 = vmul.f32 1.0, %v122
    %v124 = vperm.slane %v123, 0
    %v125 = vlaneseq
    %v126 = vshrl.u32 %v125, 7
    %128 = vset.pattern.permute.xlu0 %v126
    %129 = vperm.xlu0 %128, %v124
    %v130 = vpop.permute.xlu0 %129
    %v131 = vlaneseq
    %v132 = vshrl.u32 %v131, 7
    %v133 = vadd.s32 %v132, 8
    %134 = vset.pattern.permute.xlu0 %v133
    %135 = vperm.xlu0 %134, %v124
    %v136 = vpop.permute.xlu0 %135
    %v137 = vperm.slane %v123, 1
    %v138 = vlaneseq
    %v139 = vshrl.u32 %v138, 7
    %141 = vset.pattern.permute.xlu0 %v139
    %142 = vperm.xlu0 %141, %v137
    %v143 = vpop.permute.xlu0 %142
    %v144 = vlaneseq
    %v145 = vshrl.u32 %v144, 7
    %v146 = vadd.s32 %v145, 8
    %147 = vset.pattern.permute.xlu0 %v146
    %148 = vperm.xlu0 %147, %v137
    %v149 = vpop.permute.xlu0 %148
    %v150 = vmul.f32 %v44, %v130
    %v151 = vmul.f32 %v45, %v130
    %v152 = vmul.f32 %v46, %v136
    %v153 = vmul.f32 %v47, %v136
    %v154 = vmul.f32 %v48, %v143
    %v155 = vmul.f32 %v49, %v143
    %v156 = vmul.f32 %v50, %v149
    %v157 = vmul.f32 %v51, %v149
    %158 = vst [vmem:[#allocation7] sm:$0xff] %v150
    %159 = vst [vmem:[#allocation7 + $0x8] sm:$0xff] %v151
    %160 = vst [vmem:[#allocation7 + $0x10] sm:$0xff] %v152
    %161 = vst [vmem:[#allocation7 + $0x18] sm:$0xff] %v153
    %162 = vst [vmem:[#allocation7 + $0x20] sm:$0xff] %v154
    %163 = vst [vmem:[#allocation7 + $0x28] sm:$0xff] %v155
    %164 = vst [vmem:[#allocation7 + $0x30] sm:$0xff] %v156
    %165 = vst [vmem:[#allocation7 + $0x38] sm:$0xff] %v157
    // Predicated region
    $region18: #{tpu_custom_call.1} parent=1 // pred_check
      _
    $region19: #{tpu_custom_call.1} parent=1 // pred_check_branch
      %167 = sbr.rel (0) target = $region21
    $region20: #{tpu_custom_call.1} parent=1 // pred_region
      %169 = vsyncadd [#allocation4], 0
      %s170 = sshll.u32 [#allocation7], 4
      %s171 = int_to_ptr.vmem [resolvable:$true] %s170
      %s172 = sshll.u32 %s2, 4
      %s173 = int_to_ptr.hbm [resolvable:$true] %s172
      %178 = dma.vmem_to_hbm [thread:$0]  %s171, 1024, %s173, [#allocation4], 256, 256, 16
    $region21: #{tpu_custom_call.1} parent=1 // pred_fallthru
      _
    // Predicated region
    $region22: #{tpu_custom_call.1} parent=1 // pred_check
      _
    $region23: #{tpu_custom_call.1} parent=1 // pred_check_branch
      %180 = sbr.rel (0) target = $region25
    $region24: #{tpu_custom_call.1} parent=1 // pred_region
      %182 = dma.done [#allocation4], 1024
    $region25: #{tpu_custom_call.1} parent=1 // pred_fallthru
      _
    %183 = vsyncpa [#allocation3], 1
    %184 = vsyncpa [#allocation6], 1
    %185 = vsyncpa [#allocation4], 1

</llo_original>
